<compile_context>
chip_gen: v7x
topology: tpu7x:2x2x1
jax: 0.10.0
libtpu: 0.0.40
codegen_flags: <defaults>
</compile_context>

<pallas_src>
import jax
import jax.numpy as jnp
from jax.experimental import pallas as pl
from jax.experimental.pallas import tpu as pltpu

C_LANES = 512        # batch lanes per row (multiple of 128 -> dense vst)
MAX_TILE_R = 1024    # batch sublane-rows per grid step (multiple of 8)
SMALL_B = 16384      # below this, plain XLA beats the pallas_call overhead


def _round_up(n, m):
    return ((n + m - 1) // m) * m


def _lr_kernel(wb_ref, x_ref, o_ref):
    # wb_ref: SMEM f32[3] = [w0, w1, b]
    # x_ref : VMEM f32[2, TILE_R, C]   (feature, batch-sublanes, batch-lanes)
    # o_ref : VMEM f32[TILE_R, C]      (dense output tile)
    w0 = wb_ref[0]
    w1 = wb_ref[1]
    b = wb_ref[2]
    z = w0 * x_ref[0] + w1 * x_ref[1] + b          # two scalar-broadcast FMAs (VPU)
    # sigmoid(z) == 0.5*tanh(0.5*z) + 0.5 : single EUP transcendental.
    o_ref[...] = 0.5 * jnp.tanh(0.5 * z) + 0.5


def lr_forward(x, weight, bias, *, use_pallas=None):
    """sigmoid(x @ weight.T + bias) with a Pallas TPU kernel for large B.

    x:      (B, 2) or (2,) float32
    weight: (1, 2) float32   (PyTorch nn.Linear layout: (out, in))
    bias:   (1,)   float32
    returns (B, 1) float32   (or (1,) for a 1-D input, like nn.Linear)

    use_pallas: None = auto (XLA below SMALL_B), True/False = force.
    """
    x = jnp.asarray(x, jnp.float32)
    squeeze = x.ndim == 1
    if squeeze:
        x = x[None, :]
    B, F = x.shape
    assert F == 2, "LRmodel expects in_features=2"

    w = jnp.asarray(weight, jnp.float32).reshape(1, 2)
    b = jnp.asarray(bias, jnp.float32).reshape(1)

    if use_pallas is None:
        use_pallas = B >= SMALL_B

    if not use_pallas:
        # Small-batch fast path: pallas_call fixed overhead dominates here.
        out = jax.nn.sigmoid(x @ w.T + b)
        return out[0] if squeeze else out

    # ---- tiling: dense (R, C) batch grid, R a multiple of tile_r ----------
    rows = pl.cdiv(B, C_LANES)
    tile_r = min(MAX_TILE_R, _round_up(rows, 8))
    if rows > 8 and _round_up(rows, 8) <= tile_r:
        # Enough work for more than one minimal tile but it would fit in a
        # single step: split so the grid has >= 2 "parallel" steps (keeps both
        # TensorCores fed on v7x; harmless on single-TC v5e/v6e).
        tile_r = max(8, _round_up(pl.cdiv(rows, 2), 8))
    R = _round_up(rows, tile_r)
    Bp = R * C_LANES

    # (B, 2) -> padded (Bp, 2) -> feature-major dense (2, R, C).
    # XLA fuses pad + transpose + reshape into one copy; ideally x arrives
    # already feature-major so this pass disappears entirely.
    x_pad = jnp.pad(x, ((0, Bp - B), (0, 0)))
    x_fm = x_pad.T.reshape(2, R, C_LANES)

    # [w0, w1, b] as SMEM scalars: no padded weight vreg, no extra DMA stream.
    wb = jnp.concatenate([w.reshape(-1), b.reshape(-1)])   # f32[3]

    out_pad = pl.pallas_call(
        _lr_kernel,
        out_shape=jax.ShapeDtypeStruct((R, C_LANES), jnp.float32),
        grid_spec=pltpu.PrefetchScalarGridSpec(
            num_scalar_prefetch=0,
            grid=(R // tile_r,),
            in_specs=[
                pl.BlockSpec(memory_space=pltpu.MemorySpace.SMEM),      # wb
                pl.BlockSpec((2, tile_r, C_LANES), lambda i: (0, i, 0)),  # x tile
            ],
            out_specs=pl.BlockSpec((tile_r, C_LANES), lambda i: (i, 0)),
        ),
        compiler_params=pltpu.CompilerParams(
            dimension_semantics=("parallel",),
            # Max usage ~12 MiB double-buffered; raise the scoped limit so the
            # large tiles are accepted even on v5e's 16 MiB default.
            vmem_limit_bytes=32 << 20,
        ),
    )(wb, x_fm)

    out = out_pad.reshape(Bp)[:B].reshape(B, 1)
    return out[0] if squeeze else out


if __name__ == "__main__":
    key = jax.random.PRNGKey(0)
    k_w, k_b, k_x = jax.random.split(key, 3)

    # Deterministic parameter init mirroring nn.Linear(2, 1):
    # U(-1/sqrt(in_features), 1/sqrt(in_features))
    bound = 1.0 / jnp.sqrt(2.0)
    weight = jax.random.uniform(k_w, (1, 2), jnp.float32, -bound, bound)
    bias = jax.random.uniform(k_b, (1,), jnp.float32, -bound, bound)

    # Batch that exercises padding + a 2-step grid (still tiny data: 2 feats).
    B = 4100
    x = jax.random.normal(k_x, (B, 2), jnp.float32)
    x = x.at[0].set(jnp.array([3.0, 1.2], jnp.float32))   # the script's input

    out = jax.block_until_ready(lr_forward(x, weight, bias, use_pallas=True))
    ref = jax.nn.sigmoid(x @ weight.T + bias)
    assert out.shape == (B, 1)
    assert jnp.allclose(out, ref, atol=1e-5, rtol=1e-5)

    # 1-D input matching the original script's usage (small-B XLA fast path).
    x1d = jnp.array([3.0, 1.2], jnp.float32)
    out1d = jax.block_until_ready(lr_forward(x1d, weight, bias))
    ref1d = jax.nn.sigmoid(x1d @ weight.T + bias)
    assert out1d.shape == (1,)
    assert jnp.allclose(out1d, ref1d, atol=1e-5, rtol=1e-5)

    print("KERNEL_OK")
</pallas_src>

<mosaic_0001>
module attributes {stable_mosaic.version = 11 : i64} {
  func.func @_lr_kernel(%arg0: i32, %arg1: memref<3xf32, #tpu.memory_space<smem>>, %arg2: memref<2x8x512xf32, #tpu.memory_space<vmem>>, %arg3: memref<8x512xf32, #tpu.memory_space<vmem>>) attributes {dimension_semantics = [#tpu.dimension_semantics<parallel>], iteration_bounds = array<i64: 2>, scalar_prefetch = 0 : i64, scratch_operands = 0 : i64, tpu.core_type = #tpu.core_type<tc>, window_params = [{transform_indices = @transform_0, window_bounds = array<i64: 3>}, {transform_indices = @transform_1, window_bounds = array<i64: 2, 8, 512>}, {transform_indices = @transform_2, window_bounds = array<i64: 8, 512>}]} {
    %c0 = arith.constant 0 : index
    %0 = memref.load %arg1[%c0] : memref<3xf32, #tpu.memory_space<smem>>
    %c1 = arith.constant 1 : index
    %1 = memref.load %arg1[%c1] : memref<3xf32, #tpu.memory_space<smem>>
    %c2 = arith.constant 2 : index
    %2 = memref.load %arg1[%c2] : memref<3xf32, #tpu.memory_space<smem>>
    %c0_0 = arith.constant 0 : index
    %c0_1 = arith.constant 0 : index
    %c0_2 = arith.constant 0 : index
    %3 = vector.load %arg2[%c0_0, %c0_1, %c0_2] : memref<2x8x512xf32, #tpu.memory_space<vmem>>, vector<1x8x512xf32>
    %4 = vector.shape_cast %3 : vector<1x8x512xf32> to vector<8x512xf32>
    %5 = vector.broadcast %0 : f32 to vector<8x512xf32>
    %6 = arith.mulf %5, %4 : vector<8x512xf32>
    %c1_3 = arith.constant 1 : index
    %c0_4 = arith.constant 0 : index
    %c0_5 = arith.constant 0 : index
    %7 = vector.load %arg2[%c1_3, %c0_4, %c0_5] : memref<2x8x512xf32, #tpu.memory_space<vmem>>, vector<1x8x512xf32>
    %8 = vector.shape_cast %7 : vector<1x8x512xf32> to vector<8x512xf32>
    %9 = vector.broadcast %1 : f32 to vector<8x512xf32>
    %10 = arith.mulf %9, %8 : vector<8x512xf32>
    %11 = arith.addf %6, %10 : vector<8x512xf32>
    %12 = vector.broadcast %2 : f32 to vector<8x512xf32>
    %13 = arith.addf %11, %12 : vector<8x512xf32>
    %cst = arith.constant 5.000000e-01 : f32
    %14 = vector.broadcast %cst : f32 to vector<8x512xf32>
    %15 = arith.mulf %14, %13 : vector<8x512xf32>
    %16 = math.tanh %15 : vector<8x512xf32>
    %cst_6 = arith.constant 5.000000e-01 : f32
    %17 = vector.broadcast %cst_6 : f32 to vector<8x512xf32>
    %18 = arith.mulf %17, %16 : vector<8x512xf32>
    %cst_7 = arith.constant 5.000000e-01 : f32
    %19 = vector.broadcast %cst_7 : f32 to vector<8x512xf32>
    %20 = arith.addf %18, %19 : vector<8x512xf32>
    %c0_8 = arith.constant 0 : index
    %c0_9 = arith.constant 0 : index
    %21 = vector.load %arg3[%c0_8, %c0_9] : memref<8x512xf32, #tpu.memory_space<vmem>>, vector<8x512xf32>
    tpu.vector_store %arg3[%c0_8, %c0_9], %20 {strides = array<i32>} : memref<8x512xf32, #tpu.memory_space<vmem>>, vector<8x512xf32>,
    return
  }
  func.func @transform_0(%arg0: i32) -> i32 {
    %c0_i32 = arith.constant 0 : i32
    %c0_i32_0 = arith.constant 0 : i32
    return %c0_i32 : i32
  }
  func.func @transform_1(%arg0: i32) -> (i32, i32, i32) {
    %c0_i32 = arith.constant 0 : i32
    %c0_i32_0 = arith.constant 0 : i32
    %c0_i32_1 = arith.constant 0 : i32
    return %c0_i32, %arg0, %c0_i32_0 : i32, i32, i32
  }
  func.func @transform_2(%arg0: i32) -> (i32, i32) {
    %c0_i32 = arith.constant 0 : i32
    %c0_i32_0 = arith.constant 0 : i32
    return %arg0, %c0_i32 : i32, i32
  }
}

</mosaic_0001>

<llo_original>
// kernel: tpu_custom_call.1
$region0: #{tpu_custom_call.1}
  #allocation0 [shape = 'u32[]', space=smem, size = 0x4, offset = 0x4, fixed_abs, tag = 'smem constant byte address 0x4 - core index']
  #allocation1 [shape = 'u32[144,128]{1,0:T(1,128)}', space=vmem, size = 0x12000, scoped, tag = 'internal scratch']
  %s0 = inlined_call_operand.hbm [shape: f32[3], index: 0, kind: input, shape index: {}]
  %s1 = inlined_call_operand.hbm [shape: f32[2,16,512], index: 1, kind: input, shape index: {}]
  %s2 = inlined_call_operand.hbm [shape: f32[16,512], index: 2, kind: output, shape index: {}]
  %s3 = sld [smem:[#allocation0]]
  $region49: #{tpu_custom_call.1} parent=0
    _
  %s5 = ssub.s32 1, %s3
  %s6 = scalar_select 0, %s5, %s3
  $region1: #{tpu_custom_call.1} parent=0
    #allocation2 [shape = 'u8[512]{0}', space=smem, size = 0x200, scoped, tag = 'input window, operand 0, single buffered']
    #allocation3 [shape = 's32[2]{0}', space=sflag, size = 0x8, scoped, tag = 'scoped memory for tpu_custom_call.1']
    #allocation4 [shape = 's32[2]{0}', space=sflag, size = 0x8, scoped, tag = 'scoped memory for tpu_custom_call.1']
    #allocation5 [shape = 's32[2]{0}', space=sflag, size = 0x8, scoped, tag = 'scoped memory for tpu_custom_call.1']
    #allocation6 [shape = 'u8[65536]{0}', space=vmem, size = 0x10000, scoped, tag = 'input window, operand 1']
    #allocation7 [shape = 'u8[32768]{0}', space=vmem, size = 0x8000, scoped, tag = 'output window, operand 0']
    %7 = vsyncpa [#allocation5], 0
    %8 = vsyncpa [#allocation3], 0
    %s9 = scalar_lea.sflag [#allocation3], 1
    %10 = vsyncpa %s9, 0
    %11 = vsyncpa [#allocation4], 0
    %s12 = scalar_lea.sflag [#allocation4], 1
    %13 = vsyncpa %s12, 0
    loop: start=0, step=1, limit=4
    $region2: #{tpu_custom_call.1} parent=1 // loop_pre_header
      _
    $region3: #{tpu_custom_call.1} parent=1 // loop_header
      %s15 = sphi 0, %s19
      %p16 = scmp.ge.s32.totalorder %s15, 4
      %s23 = sphi 0, %s23
      %s25 = sphi 0, %s23
      %s26 = sphi 0, %s25
      %s40 = sphi 0, %s26
      %s46 = sphi 0, %s48
      %s49 = sphi 0, %s46
      %s50 = sphi 0, %s49
      %s66 = sphi 0, %s50
      %s72 = sphi 0, %s74
      %s75 = sphi 0, %s72
      %s76 = sphi 0, %s75
      %s92 = sphi 0, %s76
    $region4: #{tpu_custom_call.1} parent=1 // loop_header_branch
      %18 = sbr.rel (%p16) target = $region8
    $region5: #{tpu_custom_call.1} parent=1 // loop_body
      %s20 = ssub.s32 %s15, 1
      %s21 = ssub.s32 %s15, 2
      %s22 = sadd.s32 %s15, 1
      %s24 = sadd.s32 %s23, 1
      %p27 = scmp.eq.s32.totalorder %s15, 1
      %p28 = scmp.ne.s32.totalorder %s23, %s25
      %p29 = scmp.eq.s32.totalorder %s15, 0
      %p30 = por %p28, %p29
      %p31 = scmp.ne.s32.totalorder %s23, %s25
      %p32 = scmp.eq.s32.totalorder %s20, 1
      %p33 = por %p31, %p32
      %p34 = scmp.ne.s32.totalorder %s25, %s26
      %p35 = scmp.eq.s32.totalorder %s20, 0
      %p36 = por %p34, %p35
      %p37 = scmp.ne.s32.totalorder %s25, %s26
      %p38 = scmp.eq.s32.totalorder %s21, 1
      %p39 = por %p37, %p38
      %p41 = scmp.ne.s32.totalorder %s26, %s40
      %p42 = scmp.eq.s32.totalorder %s21, 0
      %p43 = por %p41, %p42
      %s44 = ssub.s32 %s15, %s22
      %p45 = scmp.eq.s32.totalorder %s44, 0
      %s47 = sadd.s32 %s46, 1
      %s48 = scalar_select %p45, %s46, %s47
      %p51 = pneg %p45
      %p52 = scmp.eq.s32.totalorder %s15, 1
      %p53 = por %p51, %p52
      %p54 = scmp.ne.s32.totalorder %s46, %s49
      %p55 = scmp.eq.s32.totalorder %s15, 0
      %p56 = por %p54, %p55
      %p57 = scmp.ne.s32.totalorder %s46, %s49
      %p58 = scmp.eq.s32.totalorder %s20, 1
      %p59 = por %p57, %p58
      %p60 = scmp.ne.s32.totalorder %s49, %s50
      %p61 = scmp.eq.s32.totalorder %s20, 0
      %p62 = por %p60, %p61
      %p63 = scmp.ne.s32.totalorder %s49, %s50
      %p64 = scmp.eq.s32.totalorder %s21, 1
      %p65 = por %p63, %p64
      %p67 = scmp.ne.s32.totalorder %s50, %s66
      %p68 = scmp.eq.s32.totalorder %s21, 0
      %p69 = por %p67, %p68
      %s70 = ssub.s32 %s15, %s22
      %p71 = scmp.eq.s32.totalorder %s70, 0
      %s73 = sadd.s32 %s72, 1
      %s74 = scalar_select %p71, %s72, %s73
      %p77 = pneg %p71
      %p78 = scmp.eq.s32.totalorder %s15, 1
      %p79 = por %p77, %p78
      %p80 = scmp.ne.s32.totalorder %s72, %s75
      %p81 = scmp.eq.s32.totalorder %s15, 0
      %p82 = por %p80, %p81
      %p83 = scmp.ne.s32.totalorder %s72, %s75
      %p84 = scmp.eq.s32.totalorder %s20, 1
      %p85 = por %p83, %p84
      %p86 = scmp.ne.s32.totalorder %s75, %s76
      %p87 = scmp.eq.s32.totalorder %s20, 0
      %p88 = por %p86, %p87
      %p89 = scmp.ne.s32.totalorder %s75, %s76
      %p90 = scmp.eq.s32.totalorder %s21, 1
      %p91 = por %p89, %p90
      %p93 = scmp.ne.s32.totalorder %s76, %s92
      %p94 = scmp.eq.s32.totalorder %s21, 0
      %p95 = por %p93, %p94
      %p96 = scmp.le.s32.totalorder 1, %s15
      %p97 = scmp.lt.s32.totalorder %s15, 3
      %p98 = pnand %p96, %p97
      %p99 = pneg %p98
      // Predicated region
      $region9: #{tpu_custom_call.1} parent=5 // pred_check
        _
      $region10: #{tpu_custom_call.1} parent=5 // pred_check_branch
        %101 = sbr.rel (%p98) target = $region12
      $region11: #{tpu_custom_call.1} parent=5 // pred_region
        %s102 = ssub.s32 %s15, 1
        // Predicated region
        $region13: #{tpu_custom_call.1} parent=11 // pred_check
          %p103 = pneg %p36
        $region14: #{tpu_custom_call.1} parent=11 // pred_check_branch
          %105 = sbr.rel (%p103) target = $region16
        $region15: #{tpu_custom_call.1} parent=11 // pred_region
          %s107 = ssub.s32 16, 16
          %108 = vsyncadd [#allocation5], %s107
          %111 = dma.hbm_to_smem %s0, 16, [#allocation2], [#allocation5]
        $region16: #{tpu_custom_call.1} parent=11 // pred_fallthru
          _
      $region12: #{tpu_custom_call.1} parent=5 // pred_fallthru
        _
      %p112 = scmp.lt.s32.totalorder %s15, 2
      // Predicated region
      $region17: #{tpu_custom_call.1} parent=5 // pred_check
        %p113 = pneg %p112
      $region18: #{tpu_custom_call.1} parent=5 // pred_check_branch
        %115 = sbr.rel (%p113) target = $region20
      $region19: #{tpu_custom_call.1} parent=5 // pred_region
        // Predicated region
        $region21: #{tpu_custom_call.1} parent=19 // pred_check
          %p116 = pneg %p56
        $region22: #{tpu_custom_call.1} parent=19 // pred_check_branch
          %118 = sbr.rel (%p116) target = $region24
        $region23: #{tpu_custom_call.1} parent=19 // pred_region
          %s119 = sand.u32 %s46, 1
          %s120 = scalar_lea.sflag [#allocation3], %s119
          %s121 = sand.u32 %s46, 1
          %s122 = smul.addr %s121, 64
          %s123 = scalar_lea.vmem [#allocation6], %s122
          %s125 = ssub.s32 1024, 1024
          %126 = vsyncadd %s120, %s125
          %s127 = smul.addr %s15, 4
          %s128 = smul.addr %s127, 128
          %s129 = scalar_lea.hbm %s1, %s128
          %s130 = sshll.u32 %s123, 4
          %s131 = int_to_ptr.vmem [resolvable:$true] %s130
          %136 = dma.hbm_to_vmem [thread:$0]  %s129, 1024, %s131, %s120, 1024, 512, 32
        $region24: #{tpu_custom_call.1} parent=19 // pred_fallthru
          _
      $region20: #{tpu_custom_call.1} parent=5 // pred_fallthru
        _
      %p137 = scmp.le.s32.totalorder 1, %s15
      %p138 = scmp.lt.s32.totalorder %s15, 3
      %p139 = pnand %p137, %p138
      %p140 = pneg %p139
      // Predicated region
      $region25: #{tpu_custom_call.1} parent=5 // pred_check
        _
      $region26: #{tpu_custom_call.1} parent=5 // pred_check_branch
        %142 = sbr.rel (%p139) target = $region28
      $region27: #{tpu_custom_call.1} parent=5 // pred_region
        %s143 = ssub.s32 %s15, 1
        // Predicated region
        $region29: #{tpu_custom_call.1} parent=27 // pred_check
          %p144 = pneg %p36
        $region30: #{tpu_custom_call.1} parent=27 // pred_check_branch
          %146 = sbr.rel (%p144) target = $region32
        $region31: #{tpu_custom_call.1} parent=27 // pred_region
          %147 = dma.done [#allocation5], 16
        $region32: #{tpu_custom_call.1} parent=27 // pred_fallthru
          _
        %s148 = sand.u32 %s49, 1
        %s149 = scalar_lea.sflag [#allocation3], %s148
        %s150 = sand.u32 %s49, 1
        %s151 = smul.addr %s150, 64
        %s152 = scalar_lea.vmem [#allocation6], %s151
        // Predicated region
        $region33: #{tpu_custom_call.1} parent=27 // pred_check
          %p153 = pneg %p62
        $region34: #{tpu_custom_call.1} parent=27 // pred_check_branch
          %155 = sbr.rel (%p153) target = $region36
        $region35: #{tpu_custom_call.1} parent=27 // pred_region
          %156 = dma.done %s149, 1024
        $region36: #{tpu_custom_call.1} parent=27 // pred_fallthru
          _
        %157 = sfence
        %p158 = pneg %p36
        %p159 = pneg %p33
        %s160 = sand.u32 %s49, 1
        %s161 = scalar_lea.sflag [#allocation3], %s160
        %s162 = sand.u32 %s49, 1
        %s163 = smul.addr %s162, 64
        %s164 = scalar_lea.vmem [#allocation6], %s163
        %p165 = pneg %p62
        %p166 = pneg %p59
        %p167 = pneg %p88
        %p168 = pneg %p85
        %s169 = sand.u32 %s75, 1
        %s170 = scalar_lea.sflag [#allocation4], %s169
        %s171 = sand.u32 %s75, 1
        %s172 = smul.addr %s171, 32
        %s173 = scalar_lea.vmem [#allocation7], %s172
        %s174 = sld [smem:[#allocation2]]
        %s175 = sld [smem:[#allocation2 + $0x1]]
        %s176 = sld [smem:[#allocation2 + $0x2]]
        %v177 = vld [vmem:[%s152] sm:$0xff]
        %v178 = vld [vmem:[%s152 + $0x8] sm:$0xff]
        %v179 = vld [vmem:[%s152 + $0x10] sm:$0xff]
        %v180 = vld [vmem:[%s152 + $0x18] sm:$0xff]
        %v181 = vstv %s174
        %v182 = vmul.f32 %v181, %v177
        %v183 = vmul.f32 %v181, %v178
        %v184 = vmul.f32 %v181, %v179
        %v185 = vmul.f32 %v181, %v180
        %s186 = scalar_lea.vmem %s152, 32 [#allocation6]
        %v187 = vld [vmem:[%s186] sm:$0xff]
        %v188 = vld [vmem:[%s186 + $0x8] sm:$0xff]
        %v189 = vld [vmem:[%s186 + $0x10] sm:$0xff]
        %v190 = vld [vmem:[%s186 + $0x18] sm:$0xff]
        %v191 = vstv %s175
        %v192 = vmul.f32 %v191, %v187
        %v193 = vmul.f32 %v191, %v188
        %v194 = vmul.f32 %v191, %v189
        %v195 = vmul.f32 %v191, %v190
        %v196 = vadd.f32 %v182, %v192
        %v197 = vadd.f32 %v183, %v193
        %v198 = vadd.f32 %v184, %v194
        %v199 = vadd.f32 %v185, %v195
        %v200 = vstv %s176
        %v201 = vadd.f32 %v196, %v200
        %v202 = vadd.f32 %v197, %v200
        %v203 = vadd.f32 %v198, %v200
        %v204 = vadd.f32 %v199, %v200
        %v205 = vmul.f32 %v201, 0.5
        %v206 = vmul.f32 %v202, 0.5
        %v207 = vmul.f32 %v203, 0.5
        %v208 = vmul.f32 %v204, 0.5
        %v209 = vtanh.pop %v205
        %v210 = vtanh.pop %v206
        %v211 = vtanh.pop %v207
        %v212 = vtanh.pop %v208
        %v213 = vmul.f32 %v209, 0.5
        %v214 = vmul.f32 %v210, 0.5
        %v215 = vmul.f32 %v211, 0.5
        %v216 = vmul.f32 %v212, 0.5
        %v217 = vadd.f32 %v213, 0.5
        %v218 = vadd.f32 %v214, 0.5
        %v219 = vadd.f32 %v215, 0.5
        %v220 = vadd.f32 %v216, 0.5
        %221 = vst [vmem:[%s173] sm:$0xff] %v217
        %222 = vst [vmem:[%s173 + $0x8] sm:$0xff] %v218
        %223 = vst [vmem:[%s173 + $0x10] sm:$0xff] %v219
        %224 = vst [vmem:[%s173 + $0x18] sm:$0xff] %v220
        %s225 = sand.u32 %s75, 1
        %s226 = scalar_lea.sflag [#allocation4], %s225
        %s227 = sand.u32 %s75, 1
        %s228 = smul.addr %s227, 32
        %s229 = scalar_lea.vmem [#allocation7], %s228
        // Predicated region
        $region37: #{tpu_custom_call.1} parent=27 // pred_check
          %p230 = pneg %p85
        $region38: #{tpu_custom_call.1} parent=27 // pred_check_branch
          %232 = sbr.rel (%p230) target = $region40
        $region39: #{tpu_custom_call.1} parent=27 // pred_region
          %s234 = ssub.s32 512, 512
          %235 = vsyncadd %s226, %s234
          %s236 = smul.addr %s20, 4
          %s237 = smul.addr %s236, 128
          %s238 = scalar_lea.hbm %s2, %s237
          %s240 = sshll.u32 %s229, 4
          %s241 = int_to_ptr.vmem [resolvable:$true] %s240
          %243 = dma.vmem_to_hbm [thread:$0]  %s241, 512, %s238, %s226
        $region40: #{tpu_custom_call.1} parent=27 // pred_fallthru
          _
      $region28: #{tpu_custom_call.1} parent=5 // pred_fallthru
        _
      %p244 = scmp.le.s32.totalorder 2, %s15
      // Predicated region
      $region41: #{tpu_custom_call.1} parent=5 // pred_check
        %p245 = pneg %p244
      $region42: #{tpu_custom_call.1} parent=5 // pred_check_branch
        %247 = sbr.rel (%p245) target = $region44
      $region43: #{tpu_custom_call.1} parent=5 // pred_region
        %s248 = ssub.s32 %s15, 2
        // Predicated region
        $region45: #{tpu_custom_call.1} parent=43 // pred_check
          %p249 = pneg %p91
        $region46: #{tpu_custom_call.1} parent=43 // pred_check_branch
          %251 = sbr.rel (%p249) target = $region48
        $region47: #{tpu_custom_call.1} parent=43 // pred_region
          %s252 = sand.u32 %s76, 1
          %s253 = scalar_lea.sflag [#allocation4], %s252
          %s254 = sand.u32 %s76, 1
          %s255 = smul.addr %s254, 32
          %s256 = scalar_lea.vmem [#allocation7], %s255
          %257 = dma.done %s253, 512
        $region48: #{tpu_custom_call.1} parent=43 // pred_fallthru
          _
      $region44: #{tpu_custom_call.1} parent=5 // pred_fallthru
        _
    $region6: #{tpu_custom_call.1} parent=1 // loop_footer
      %s19 = sadd.s32 1, %s15
    $region7: #{tpu_custom_call.1} parent=1 // loop_footer_branch
      %14 = sbr.rel target = $region3
    $region8: #{tpu_custom_call.1} parent=1 // loop_exit
      _
    %258 = vsyncpa [#allocation3], 1
    %s259 = scalar_lea.sflag [#allocation3], 1
    %260 = vsyncpa %s259, 1
    %261 = vsyncpa [#allocation4], 1
    %s262 = scalar_lea.sflag [#allocation4], 1
    %263 = vsyncpa %s262, 1
    %264 = vsyncpa [#allocation5], 1
    %s265 = scalar_lea.sflag [#allocation5], 1
    %266 = vsyncpa %s265, 1

</llo_original>
